<compile_context>
chip_gen: v7x
topology: tpu7x:2x2x1
jax: 0.10.0
libtpu: 0.0.40
codegen_flags: <defaults>
</compile_context>

<pallas_src>
import functools

import jax
import jax.numpy as jnp
from jax.experimental import pallas as pl
from jax.experimental.pallas import tpu as pltpu

LANE = 128


def _bdc_bce_partial_kernel(l_ref, y_ref, out_ref, *, two_class, n_valid,
                            need_mask, tm):
    """One grid step: reduce a (tm, 128) row block to (4, 128) lane partials."""
    if two_class:
        # softmax([l0, l1])[1] == sigmoid(l1 - l0)
        z = l_ref[1].astype(jnp.float32) - l_ref[0].astype(jnp.float32)
    else:
        z = l_ref[0].astype(jnp.float32)
    y = y_ref[...].astype(jnp.float32)

    # Logit-space (log-sigmoid) formulation:
    #   log p       = min(z, 0) - log(1 + exp(-|z|))
    #   log (1 - p) = log p - z
    t = jnp.log(1.0 + jnp.exp(-jnp.abs(z)))
    ls = jnp.minimum(z, 0.0) - t            # log sigmoid(z)  (= log p)
    p = jnp.exp(ls)                         # sigmoid(z)
    log_p = jnp.maximum(ls, -100.0)         # PyTorch BCELoss clamps log at -100
    log_1mp = jnp.maximum(ls - z, -100.0)   # log sigmoid(-z) = log(1 - p)
    bce = -(y * log_p + (1.0 - y) * log_1mp)

    if need_mask:
        i = pl.program_id(0)
        row = jax.lax.broadcasted_iota(jnp.int32, (tm, LANE), 0)
        lane = jax.lax.broadcasted_iota(jnp.int32, (tm, LANE), 1)
        flat = (i * tm + row) * LANE + lane
        valid = flat < n_valid
        zero = jnp.zeros_like(p)
        p = jnp.where(valid, p, zero)
        y = jnp.where(valid, y, zero)
        bce = jnp.where(valid, bce, zero)

    # Sublane (XLU) reduction inside the block; only 4 lane-vectors get stored.
    s_py = jnp.sum(p * y, axis=0, keepdims=True)   # (1, 128)
    s_p = jnp.sum(p, axis=0, keepdims=True)
    s_y = jnp.sum(y, axis=0, keepdims=True)
    s_bce = jnp.sum(bce, axis=0, keepdims=True)
    out_ref[0] = jnp.concatenate([s_py, s_p, s_y, s_bce], axis=0)  # (4, 128)


def bdc_bce_loss(logit, labels, *, ignore_index=None, block_rows=1024):
    """Pallas implementation of BDC_BCE.forward (ignore_index=None path)."""
    if ignore_index is not None:
        # TODO(synk): ignore_index branch of the reference is broken upstream
        # (undefined `outs`, invalid BCELoss kwargs) and is not implemented.
        raise NotImplementedError("ignore_index path not implemented")

    N, C, H, W = logit.shape
    assert C in (1, 2), "logit.shape[1] must be <= 2"
    assert labels.shape == (N, 1, H, W)

    total = N * H * W
    rows = -(-total // LANE)
    padded = rows * LANE

    if C == 2:
        # Channel-major view; one native-dtype copy (channel planes are
        # interleaved in NCHW, so this pre-pass is unavoidable here).
        lflat = jnp.moveaxis(logit, 1, 0).reshape(C, total)
    else:
        lflat = logit.reshape(1, total)          # contiguous -> free reshape
    yflat = labels.reshape(1, total)             # contiguous -> free reshape

    if padded != total:
        pad = padded - total
        lflat = jnp.pad(lflat, ((0, 0), (0, pad)))
        yflat = jnp.pad(yflat, ((0, 0), (0, pad)))

    l3 = lflat.reshape(C, rows, LANE)
    y2 = yflat.reshape(rows, LANE)

    # Large row blocks (multiple of 32 sublanes -> valid for f32/bf16/int8);
    # if the whole array is smaller, use it as a single full-extent block.
    tm = rows if rows <= block_rows else block_rows
    nblocks = -(-rows // tm)
    need_mask = (padded != total) or (rows % tm != 0)

    kernel = functools.partial(
        _bdc_bce_partial_kernel,
        two_class=(C == 2), n_valid=total, need_mask=need_mask, tm=tm)

    partials = pl.pallas_call(
        kernel,
        out_shape=jax.ShapeDtypeStruct((nblocks, 4, LANE), jnp.float32),
        grid_spec=pl.GridSpec(
            grid=(nblocks,),
            in_specs=[
                pl.BlockSpec((C, tm, LANE), lambda i: (0, i, 0)),
                pl.BlockSpec((tm, LANE), lambda i: (i, 0)),
            ],
            out_specs=pl.BlockSpec((1, 4, LANE), lambda i: (i, 0, 0)),
        ),
        compiler_params=pltpu.CompilerParams(
            dimension_semantics=("parallel",),
        ),
    )(l3, y2)

    # Tiny epilogue in JAX: finish the scalar dice/BCE formula.  Keeping the
    # grid axis 'parallel' (no carried accumulator) lets both TensorCores work.
    s_py, s_p, s_y, s_bce = jnp.sum(partials, axis=(0, 2))
    loss2 = s_bce / jnp.float32(total)                        # BCE mean
    loss1 = -(2.0 * s_py + 0.0001) / (s_p + s_y + 0.0001)     # soft dice
    return loss1 + loss2


def bdc_bce_reference(logit, labels):
    """Pure-JAX reference mirroring the PyTorch forward (ignore_index=None)."""
    C = logit.shape[1]
    if C == 1:
        p = jax.nn.sigmoid(logit)
    else:
        p = jax.nn.softmax(logit, axis=1)[:, 1:]
    y = labels.astype(jnp.float32)
    log_p = jnp.maximum(jnp.log(p), -100.0)
    log_1mp = jnp.maximum(jnp.log(1.0 - p), -100.0)
    loss2 = jnp.mean(-(y * log_p + (1.0 - y) * log_1mp))
    loss1 = -(2.0 * jnp.sum(p * y) + 0.0001) / (
        jnp.sum(p) + jnp.sum(y) + 0.0001
    )
    return loss1 + loss2


if __name__ == "__main__":
    key = jax.random.PRNGKey(0)
    k1, k2, k3, k4 = jax.random.split(key, 4)

    # Two-class (softmax) path.
    N, C, H, W = 2, 2, 16, 16
    logit2 = jax.random.normal(k1, (N, C, H, W), dtype=jnp.float32)
    labels2 = jax.random.bernoulli(k2, p=0.4, shape=(N, 1, H, W)).astype(
        jnp.float32
    )
    out2 = jax.block_until_ready(bdc_bce_loss(logit2, labels2))
    ref2 = bdc_bce_reference(logit2, labels2)
    assert jnp.allclose(out2, ref2, rtol=1e-5, atol=1e-5), (out2, ref2)

    # Single-class (sigmoid) path with a ragged size (exercises the mask).
    N1, H1, W1 = 1, 12, 16   # N*H*W = 192, not a multiple of 128
    logit1 = jax.random.normal(k3, (N1, 1, H1, W1), dtype=jnp.float32)
    labels1 = jax.random.bernoulli(k4, p=0.3, shape=(N1, 1, H1, W1)).astype(
        jnp.float32
    )
    out1 = jax.block_until_ready(bdc_bce_loss(logit1, labels1))
    ref1 = bdc_bce_reference(logit1, labels1)
    assert jnp.allclose(out1, ref1, rtol=1e-5, atol=1e-5), (out1, ref1)

    print("KERNEL_OK")
</pallas_src>

<mosaic_0001>
module attributes {stable_mosaic.version = 11 : i64} {
  func.func @_bdc_bce_partial_kernel(%arg0: i32, %arg1: memref<2x4x128xf32, #tpu.memory_space<vmem>>, %arg2: memref<4x128xf32, #tpu.memory_space<vmem>>, %arg3: memref<1x4x128xf32, #tpu.memory_space<vmem>>) attributes {dimension_semantics = [#tpu.dimension_semantics<parallel>], iteration_bounds = array<i64: 1>, scalar_prefetch = 0 : i64, scratch_operands = 0 : i64, tpu.core_type = #tpu.core_type<tc>, window_params = [{transform_indices = @transform_0, window_bounds = array<i64: 2, 4, 128>}, {transform_indices = @transform_1, window_bounds = array<i64: 4, 128>}, {transform_indices = @transform_2, window_bounds = array<i64: 1, 4, 128>}]} {
    %c1 = arith.constant 1 : index
    %c0 = arith.constant 0 : index
    %c0_0 = arith.constant 0 : index
    %0 = vector.load %arg1[%c1, %c0, %c0_0] : memref<2x4x128xf32, #tpu.memory_space<vmem>>, vector<1x4x128xf32>
    %1 = vector.shape_cast %0 : vector<1x4x128xf32> to vector<4x128xf32>
    %c0_1 = arith.constant 0 : index
    %c0_2 = arith.constant 0 : index
    %c0_3 = arith.constant 0 : index
    %2 = vector.load %arg1[%c0_1, %c0_2, %c0_3] : memref<2x4x128xf32, #tpu.memory_space<vmem>>, vector<1x4x128xf32>
    %3 = vector.shape_cast %2 : vector<1x4x128xf32> to vector<4x128xf32>
    %4 = arith.subf %1, %3 : vector<4x128xf32>
    %c0_4 = arith.constant 0 : index
    %c0_5 = arith.constant 0 : index
    %5 = vector.load %arg2[%c0_4, %c0_5] : memref<4x128xf32, #tpu.memory_space<vmem>>, vector<4x128xf32>
    %6 = math.absf %4 : vector<4x128xf32>
    %cst = arith.constant 0.000000e+00 : f32
    %7 = vector.broadcast %cst : f32 to vector<4x128xf32>
    %8 = arith.subf %7, %6 : vector<4x128xf32>
    %9 = math.exp %8 : vector<4x128xf32>
    %cst_6 = arith.constant 1.000000e+00 : f32
    %10 = vector.broadcast %cst_6 : f32 to vector<4x128xf32>
    %11 = arith.addf %10, %9 : vector<4x128xf32>
    %12 = math.log %11 : vector<4x128xf32>
    %cst_7 = arith.constant 0.000000e+00 : f32
    %13 = vector.broadcast %cst_7 : f32 to vector<4x128xf32>
    %14 = arith.minimumf %4, %13 : vector<4x128xf32>
    %15 = arith.subf %14, %12 : vector<4x128xf32>
    %16 = math.exp %15 : vector<4x128xf32>
    %cst_8 = arith.constant -1.000000e+02 : f32
    %17 = vector.broadcast %cst_8 : f32 to vector<4x128xf32>
    %18 = arith.maximumf %15, %17 : vector<4x128xf32>
    %19 = arith.subf %15, %4 : vector<4x128xf32>
    %cst_9 = arith.constant -1.000000e+02 : f32
    %20 = vector.broadcast %cst_9 : f32 to vector<4x128xf32>
    %21 = arith.maximumf %19, %20 : vector<4x128xf32>
    %22 = arith.mulf %5, %18 : vector<4x128xf32>
    %cst_10 = arith.constant 1.000000e+00 : f32
    %23 = vector.broadcast %cst_10 : f32 to vector<4x128xf32>
    %24 = arith.subf %23, %5 : vector<4x128xf32>
    %25 = arith.mulf %24, %21 : vector<4x128xf32>
    %26 = arith.addf %22, %25 : vector<4x128xf32>
    %cst_11 = arith.constant 0.000000e+00 : f32
    %27 = vector.broadcast %cst_11 : f32 to vector<4x128xf32>
    %28 = arith.subf %27, %26 : vector<4x128xf32>
    %29 = arith.mulf %16, %5 : vector<4x128xf32>
    %cst_12 = arith.constant dense<0.000000e+00> : vector<128xf32>
    %30 = vector.multi_reduction <add>, %29, %cst_12 [0] : vector<4x128xf32> to vector<128xf32>
    %31 = vector.shape_cast %30 : vector<128xf32> to vector<1x128xf32>
    %cst_13 = arith.constant dense<0.000000e+00> : vector<128xf32>
    %32 = vector.multi_reduction <add>, %16, %cst_13 [0] : vector<4x128xf32> to vector<128xf32>
    %33 = vector.shape_cast %32 : vector<128xf32> to vector<1x128xf32>
    %cst_14 = arith.constant dense<0.000000e+00> : vector<128xf32>
    %34 = vector.multi_reduction <add>, %5, %cst_14 [0] : vector<4x128xf32> to vector<128xf32>
    %35 = vector.shape_cast %34 : vector<128xf32> to vector<1x128xf32>
    %cst_15 = arith.constant dense<0.000000e+00> : vector<128xf32>
    %36 = vector.multi_reduction <add>, %28, %cst_15 [0] : vector<4x128xf32> to vector<128xf32>
    %37 = vector.shape_cast %36 : vector<128xf32> to vector<1x128xf32>
    %38 = tpu.concatenate %31, %33, %35, %37 in 0 : vector<1x128xf32>, vector<1x128xf32>, vector<1x128xf32>, vector<1x128xf32> -> vector<4x128xf32>
    %c0_16 = arith.constant 0 : index
    %c0_17 = arith.constant 0 : index
    %c0_18 = arith.constant 0 : index
    %39 = vector.load %arg3[%c0_16, %c0_17, %c0_18] : memref<1x4x128xf32, #tpu.memory_space<vmem>>, vector<1x4x128xf32>
    %40 = vector.shape_cast %39 : vector<1x4x128xf32> to vector<4x128xf32>
    %41 = vector.shape_cast %38 : vector<4x128xf32> to vector<1x4x128xf32>
    tpu.vector_store %arg3[%c0_16, %c0_17, %c0_18], %41 {strides = array<i32>} : memref<1x4x128xf32, #tpu.memory_space<vmem>>, vector<1x4x128xf32>,
    return
  }
  func.func @transform_0(%arg0: i32) -> (i32, i32, i32) {
    %c0_i32 = arith.constant 0 : i32
    %c0_i32_0 = arith.constant 0 : i32
    %c0_i32_1 = arith.constant 0 : i32
    return %c0_i32, %arg0, %c0_i32_0 : i32, i32, i32
  }
  func.func @transform_1(%arg0: i32) -> (i32, i32) {
    %c0_i32 = arith.constant 0 : i32
    %c0_i32_0 = arith.constant 0 : i32
    return %arg0, %c0_i32 : i32, i32
  }
  func.func @transform_2(%arg0: i32) -> (i32, i32, i32) {
    %c0_i32 = arith.constant 0 : i32
    %c0_i32_0 = arith.constant 0 : i32
    %c0_i32_1 = arith.constant 0 : i32
    return %arg0, %c0_i32, %c0_i32_0 : i32, i32, i32
  }
}

</mosaic_0001>

<llo_original>
// kernel: tpu_custom_call.1
$region0: #{tpu_custom_call.1}
  #allocation0 [shape = 'u32[]', space=smem, size = 0x4, offset = 0x4, fixed_abs, tag = 'smem constant byte address 0x4 - core index']
  #allocation1 [shape = 'u32[144,128]{1,0:T(1,128)}', space=vmem, size = 0x12000, scoped, tag = 'internal scratch']
  %s0 = inlined_call_operand.hbm [shape: f32[2,4,128], index: 0, kind: input, shape index: {}]
  %s1 = inlined_call_operand.hbm [shape: f32[4,128], index: 1, kind: input, shape index: {}]
  %s2 = inlined_call_operand.hbm [shape: f32[1,4,128], index: 2, kind: output, shape index: {}]
  %s3 = sld [smem:[#allocation0]]
  $region26: #{tpu_custom_call.1} parent=0
    _
  %s5 = ssub.s32 1, %s3
  %s6 = scalar_select 0, %s5, %s3
  $region1: #{tpu_custom_call.1} parent=0
    #allocation2 [shape = 'u8[4096]{0}', space=vmem, size = 0x1000, scoped, tag = 'input window, operand 0, single buffered']
    #allocation3 [shape = 's32[1]{0}', space=sflag, size = 0x4, scoped, tag = 'scoped memory for tpu_custom_call.1']
    #allocation4 [shape = 's32[1]{0}', space=sflag, size = 0x4, scoped, tag = 'scoped memory for tpu_custom_call.1']
    #allocation5 [shape = 'u8[2048]{0}', space=vmem, size = 0x800, scoped, tag = 'input window, operand 1, single buffered']
    #allocation6 [shape = 's32[1]{0}', space=sflag, size = 0x4, scoped, tag = 'scoped memory for tpu_custom_call.1']
    #allocation7 [shape = 'u8[2048]{0}', space=vmem, size = 0x800, scoped, tag = 'output window, operand 0, single buffered']
    %7 = vsyncpa [#allocation3], 0
    %8 = vsyncpa [#allocation6], 0
    %9 = vsyncpa [#allocation4], 0
    // Predicated region
    $region2: #{tpu_custom_call.1} parent=1 // pred_check
      _
    $region3: #{tpu_custom_call.1} parent=1 // pred_check_branch
      %11 = sbr.rel (0) target = $region5
    $region4: #{tpu_custom_call.1} parent=1 // pred_region
      %s13 = ssub.s32 128, 128
      %14 = vsyncadd [#allocation3], %s13
      %s15 = sshll.u32 [#allocation2], 4
      %s16 = int_to_ptr.vmem [resolvable:$true] %s15
      %21 = dma.hbm_to_vmem [thread:$0]  %s0, 128, %s16, [#allocation3], 64, 64, 4
    $region5: #{tpu_custom_call.1} parent=1 // pred_fallthru
      _
    // Predicated region
    $region6: #{tpu_custom_call.1} parent=1 // pred_check
      _
    $region7: #{tpu_custom_call.1} parent=1 // pred_check_branch
      %23 = sbr.rel (0) target = $region9
    $region8: #{tpu_custom_call.1} parent=1 // pred_region
      %s25 = ssub.s32 64, 64
      %26 = vsyncadd [#allocation6], %s25
      %s28 = sshll.u32 [#allocation5], 4
      %s29 = int_to_ptr.vmem [resolvable:$true] %s28
      %31 = dma.hbm_to_vmem [thread:$0]  %s1, 64, %s29, [#allocation6]
    $region9: #{tpu_custom_call.1} parent=1 // pred_fallthru
      _
    // Predicated region
    $region10: #{tpu_custom_call.1} parent=1 // pred_check
      _
    $region11: #{tpu_custom_call.1} parent=1 // pred_check_branch
      %33 = sbr.rel (0) target = $region13
    $region12: #{tpu_custom_call.1} parent=1 // pred_region
      %34 = dma.done [#allocation3], 128
    $region13: #{tpu_custom_call.1} parent=1 // pred_fallthru
      _
    // Predicated region
    $region14: #{tpu_custom_call.1} parent=1 // pred_check
      _
    $region15: #{tpu_custom_call.1} parent=1 // pred_check_branch
      %36 = sbr.rel (0) target = $region17
    $region16: #{tpu_custom_call.1} parent=1 // pred_region
      %37 = dma.done [#allocation6], 64
    $region17: #{tpu_custom_call.1} parent=1 // pred_fallthru
      _
    %s38 = scalar_lea.vmem [#allocation2], 4
    %v39 = vld [vmem:[%s38] sm:$0xf]
    %v40 = vld [vmem:[#allocation2] sm:$0xf]
    %v41 = vsub.f32 %v39, %v40
    %v42 = vld [vmem:[#allocation5] sm:$0xf]
    %v43 = vand.u32 2147483647, %v41
    %v44 = vsub.f32 0.0, %v43
    %v45 = vmul.f32 %v44, 1.442695
    %v46 = vpow.pop %v45
    %v47 = vadd.f32 %v46, 1.0
    %v48 = vlog2.pop %v47
    %v49 = vmul.f32 %v48, 0.6931472
    %v50 = vmin.f32 %v41, 0.0
    %v51 = vsub.f32 %v50, %v49
    %v52 = vmul.f32 %v51, 1.442695
    %v53 = vpow.pop %v52
    %v54 = vmax.f32 %v51, -100.0
    %v55 = vsub.f32 %v51, %v41
    %v56 = vmax.f32 %v55, -100.0
    %v57 = vmul.f32 %v42, %v54
    %v58 = vsub.f32 1.0, %v42
    %v59 = vmul.f32 %v58, %v56
    %v60 = vadd.f32 %v57, %v59
    %v61 = vsub.f32 0.0, %v60
    %v62 = vmul.f32 %v53, %v42
    %vm63 = vcmask 1043456
    %v64 = vsel %vm63, %v62, 0.0
    %v65 = vrot.slane %v64, 4
    %v66 = vadd.f32 %v64, %v65
    %v67 = vrot.slane %v66, 2
    %v68 = vadd.f32 %v66, %v67
    %v69 = vrot.slane %v68, 1
    %v70 = vadd.f32 %v68, %v69
    %v71 = vsel %vm63, %v53, 0.0
    %v72 = vrot.slane %v71, 4
    %v73 = vadd.f32 %v71, %v72
    %v74 = vrot.slane %v73, 2
    %v75 = vadd.f32 %v73, %v74
    %v76 = vrot.slane %v75, 1
    %v77 = vadd.f32 %v75, %v76
    %v78 = vsel %vm63, %v42, 0.0
    %v79 = vrot.slane %v78, 4
    %v80 = vadd.f32 %v78, %v79
    %v81 = vrot.slane %v80, 2
    %v82 = vadd.f32 %v80, %v81
    %v83 = vrot.slane %v82, 1
    %v84 = vadd.f32 %v82, %v83
    %v85 = vsel %vm63, %v61, 0.0
    %v86 = vrot.slane %v85, 4
    %v87 = vadd.f32 %v85, %v86
    %v88 = vrot.slane %v87, 2
    %v89 = vadd.f32 %v87, %v88
    %v90 = vrot.slane %v89, 1
    %v91 = vadd.f32 %v89, %v90
    %vm92 = vcmask 1040384
    %v93 = vsel %vm92, %v70, %v77
    %vm94 = vcmask 1041408
    %v95 = vsel %vm94, %v93, %v84
    %vm96 = vcmask 1042432
    %v97 = vsel %vm96, %v95, %v91
    %98 = vst [vmem:[#allocation7] sm:$0xf] %v97
    // Predicated region
    $region18: #{tpu_custom_call.1} parent=1 // pred_check
      _
    $region19: #{tpu_custom_call.1} parent=1 // pred_check_branch
      %100 = sbr.rel (0) target = $region21
    $region20: #{tpu_custom_call.1} parent=1 // pred_region
      %s102 = ssub.s32 64, 64
      %103 = vsyncadd [#allocation4], %s102
      %s105 = sshll.u32 [#allocation7], 4
      %s106 = int_to_ptr.vmem [resolvable:$true] %s105
      %108 = dma.vmem_to_hbm [thread:$0]  %s106, 64, %s2, [#allocation4]
    $region21: #{tpu_custom_call.1} parent=1 // pred_fallthru
      _
    // Predicated region
    $region22: #{tpu_custom_call.1} parent=1 // pred_check
      _
    $region23: #{tpu_custom_call.1} parent=1 // pred_check_branch
      %110 = sbr.rel (0) target = $region25
    $region24: #{tpu_custom_call.1} parent=1 // pred_region
      %111 = dma.done [#allocation4], 64
    $region25: #{tpu_custom_call.1} parent=1 // pred_fallthru
      _
    %112 = vsyncpa [#allocation3], 1
    %113 = vsyncpa [#allocation6], 1
    %114 = vsyncpa [#allocation4], 1

</llo_original>
